<compile_context>
chip_gen: v7x
topology: tpu7x:2x2x1
jax: 0.10.0
libtpu: 0.0.40
codegen_flags: <defaults>
</compile_context>

<pallas_src>
import functools
import math

import jax
import jax.numpy as jnp
from jax.experimental import pallas as pl
from jax.experimental.pallas import tpu as pltpu

LANE = 128
SUBLANE = 8
NCORES = 2  # parallel grid axis; shards across TensorCores on v7x


def _physics_l1_kernel(d_ref, a_ref, p_ref, o_ref, acc_ref, *,
                       rows, row_tile, blocks_per_core, needs_mask):
    c = pl.program_id(0)   # core-parallel axis
    i = pl.program_id(1)   # reduction axis (arbitrary)

    @pl.when(i == 0)
    def _():
        acc_ref[...] = jnp.zeros_like(acc_ref)

    d = d_ref[...].astype(jnp.float32)
    a = a_ref[...].astype(jnp.float32)
    p = p_ref[...].astype(jnp.float32)
    v = jnp.abs(d - a * p)                       # pure VPU on full vregs

    if needs_mask:
        # Zero rows past the logical end: ragged last block and the clamped,
        # fully out-of-range blocks of the second core.
        block = c * blocks_per_core + i
        row_ids = block * row_tile + jax.lax.broadcasted_iota(
            jnp.int32, (row_tile, LANE), 0)
        v = jnp.where(row_ids < rows, v, 0.0)

    # Fold the (row_tile, 128) block into one vreg-sized accumulator using
    # cross-vreg adds only (no XLU); the final reduction happens in the wrapper.
    acc_ref[...] += v.reshape(row_tile // SUBLANE, SUBLANE, LANE).sum(axis=0)

    @pl.when(i == pl.num_programs(1) - 1)
    def _():
        o_ref[...] = acc_ref[...]


def physics_loss_split(B_demag, B_ana, B_pred, *, row_tile=2048):
    """mean(|B_demag - B_ana * B_pred|) with pre-split contiguous operands."""
    B_demag = jnp.asarray(B_demag)
    B_ana = jnp.asarray(B_ana)
    B_pred = jnp.asarray(B_pred)

    out_dtype = jnp.result_type(B_demag.dtype, B_ana.dtype, B_pred.dtype)
    if not jnp.issubdtype(out_dtype, jnp.floating):
        out_dtype = jnp.float32

    full = jnp.broadcast_shapes(B_demag.shape, B_ana.shape, B_pred.shape)
    n = math.prod(full)
    if n == 0:
        return jnp.full((), jnp.nan, out_dtype)

    # TODO(synk): broadcasts are materialized; for a genuinely smaller B_pred a
    # BlockSpec index_map broadcast would avoid the extra HBM pass.
    def prep(x):
        if x.shape != full:
            x = jnp.broadcast_to(x, full)
        return x.reshape(-1)

    d, a, p = prep(B_demag), prep(B_ana), prep(B_pred)

    # Lane-dense (rows, 128) view. Pad only to the next 8*128 boundary
    # (zero pads contribute 0 to the L1 sum - exact), not to a tile multiple.
    chunk = SUBLANE * LANE
    padded_n = ((n + chunk - 1) // chunk) * chunk
    pad = padded_n - n
    rows = padded_n // LANE          # always a multiple of 8

    def to2d(x):
        if pad:
            x = jnp.pad(x, (0, pad))
        return x.reshape(rows, LANE)

    d2, a2, p2 = to2d(d), to2d(a), to2d(p)

    rt = max(SUBLANE, (int(row_tile) // SUBLANE) * SUBLANE)
    rt = min(rt, rows)
    total_blocks = (rows + rt - 1) // rt
    blocks_per_core = (total_blocks + NCORES - 1) // NCORES
    needs_mask = (total_blocks * rt != rows) or (
        NCORES * blocks_per_core != total_blocks)

    def in_map(c, i):
        # Clamp: the second core may own fewer real blocks; clamped blocks are
        # fully masked in-kernel, so re-reading the last valid block is safe.
        return (jnp.minimum(c * blocks_per_core + i, total_blocks - 1), 0)

    kernel = functools.partial(
        _physics_l1_kernel, rows=rows, row_tile=rt,
        blocks_per_core=blocks_per_core, needs_mask=needs_mask)

    # Double-buffered inputs dominate VMEM; scale the limit with the tile so
    # larger caller-requested tiles (e.g. on v7x) are not rejected.
    vmem_bytes = sum(2 * rt * LANE * x.dtype.itemsize for x in (d2, a2, p2))
    vmem_limit = int(max(vmem_bytes + (2 << 20), 16 << 20))

    partials = pl.pallas_call(
        kernel,
        out_shape=jax.ShapeDtypeStruct((NCORES * SUBLANE, LANE), jnp.float32),
        grid_spec=pltpu.PrefetchScalarGridSpec(
            num_scalar_prefetch=0,
            grid=(NCORES, blocks_per_core),
            in_specs=[pl.BlockSpec((rt, LANE), in_map)] * 3,
            out_specs=pl.BlockSpec((SUBLANE, LANE), lambda c, i: (c, 0)),
            scratch_shapes=[pltpu.VMEM((SUBLANE, LANE), jnp.float32)],
        ),
        compiler_params=pltpu.CompilerParams(
            dimension_semantics=("parallel", "arbitrary"),
            vmem_limit_bytes=vmem_limit),
    )(d2, a2, p2)

    loss = jnp.sum(partials) * (1.0 / float(n))
    return loss.astype(out_dtype)


def physics_loss(B, B_pred, *, row_tile=2048):
    """PhysicsLoss.forward: mean(|B[..., :3] - B[..., 3:] * B_pred|)."""
    B = jnp.asarray(B)
    # NOTE: slicing the interleaved (..., 6) array costs one extra XLA copy
    # before the kernel; callers with contiguous operands should prefer
    # physics_loss_split.
    return physics_loss_split(B[..., :3], B[..., 3:], B_pred,
                              row_tile=row_tile)


def reference_physics_loss(B, B_pred):
    return jnp.mean(jnp.abs(B[..., :3] - B[..., 3:] * B_pred))


if __name__ == "__main__":
    key = jax.random.PRNGKey(0)
    kb, kp, kb2, kp2, kb3, kp3 = jax.random.split(key, 6)

    # Small case mirroring the module: single block; core 1 fully masked.
    B = jax.random.normal(kb, (2, 16, 6), jnp.float32)
    P = jax.random.normal(kp, (2, 16, 3), jnp.float32)
    loss = jax.block_until_ready(physics_loss(B, P))
    ref = reference_physics_loss(B, P)
    assert loss.shape == ()
    assert jnp.allclose(loss, ref, atol=1e-4, rtol=1e-4), (loss, ref)

    # Multi-step accumulation + odd block count (clamped block on core 1).
    B2 = jax.random.normal(kb2, (4, 512, 6), jnp.float32)
    P2 = jax.random.normal(kp2, (4, 512, 3), jnp.float32)
    loss2 = jax.block_until_ready(physics_loss(B2, P2, row_tile=16))
    ref2 = reference_physics_loss(B2, P2)
    assert jnp.allclose(loss2, ref2, atol=1e-4, rtol=1e-4), (loss2, ref2)

    # Ragged last block (rows not a multiple of row_tile) -> in-kernel mask.
    B3 = jax.random.normal(kb3, (2, 400, 6), jnp.float32)
    P3 = jax.random.normal(kp3, (2, 400, 3), jnp.float32)
    loss3 = jax.block_until_ready(physics_loss(B3, P3, row_tile=16))
    ref3 = reference_physics_loss(B3, P3)
    assert jnp.allclose(loss3, ref3, atol=1e-4, rtol=1e-4), (loss3, ref3)

    print("KERNEL_OK")
</pallas_src>

<mosaic_0001>
module attributes {stable_mosaic.version = 11 : i64} {
  func.func @_physics_l1_kernel(%arg0: i32, %arg1: i32, %arg2: memref<8x128xf32, #tpu.memory_space<vmem>>, %arg3: memref<8x128xf32, #tpu.memory_space<vmem>>, %arg4: memref<8x128xf32, #tpu.memory_space<vmem>>, %arg5: memref<8x128xf32, #tpu.memory_space<vmem>>, %arg6: memref<8x128xf32, #tpu.memory_space<vmem>>) attributes {dimension_semantics = [#tpu.dimension_semantics<parallel>, #tpu.dimension_semantics<arbitrary>], iteration_bounds = array<i64: 2, 1>, scalar_prefetch = 0 : i64, scratch_operands = 1 : i64, tpu.core_type = #tpu.core_type<tc>, window_params = [{transform_indices = @transform_0, window_bounds = array<i64: 8, 128>}, {transform_indices = @transform_1, window_bounds = array<i64: 8, 128>}, {transform_indices = @transform_2, window_bounds = array<i64: 8, 128>}, {transform_indices = @transform_3, window_bounds = array<i64: 8, 128>}]} {
    %c0_i32 = arith.constant 0 : i32
    %0 = arith.cmpi eq, %arg1, %c0_i32 : i32
    %1 = arith.extui %0 : i1 to i32
    %c0_i32_0 = arith.constant 0 : i32
    %2 = arith.cmpi ne, %1, %c0_i32_0 : i32
    scf.if %2 {
      %cst_14 = arith.constant 0.000000e+00 : f32
      %27 = vector.broadcast %cst_14 : f32 to vector<8x128xf32>
      %c0_15 = arith.constant 0 : index
      %c0_16 = arith.constant 0 : index
      %28 = vector.load %arg6[%c0_15, %c0_16] : memref<8x128xf32, #tpu.memory_space<vmem>>, vector<8x128xf32>
      tpu.vector_store %arg6[%c0_15, %c0_16], %27 {strides = array<i32>} : memref<8x128xf32, #tpu.memory_space<vmem>>, vector<8x128xf32>,
    } else {
    }
    %c0 = arith.constant 0 : index
    %c0_1 = arith.constant 0 : index
    %3 = vector.load %arg2[%c0, %c0_1] : memref<8x128xf32, #tpu.memory_space<vmem>>, vector<8x128xf32>
    %c0_2 = arith.constant 0 : index
    %c0_3 = arith.constant 0 : index
    %4 = vector.load %arg3[%c0_2, %c0_3] : memref<8x128xf32, #tpu.memory_space<vmem>>, vector<8x128xf32>
    %c0_4 = arith.constant 0 : index
    %c0_5 = arith.constant 0 : index
    %5 = vector.load %arg4[%c0_4, %c0_5] : memref<8x128xf32, #tpu.memory_space<vmem>>, vector<8x128xf32>
    %6 = arith.mulf %4, %5 : vector<8x128xf32>
    %7 = arith.subf %3, %6 : vector<8x128xf32>
    %8 = math.absf %7 : vector<8x128xf32>
    %c1_i32 = arith.constant 1 : i32
    %9 = arith.muli %arg0, %c1_i32 : i32
    %10 = arith.addi %9, %arg1 : i32
    %c8_i32 = arith.constant 8 : i32
    %11 = arith.muli %10, %c8_i32 : i32
    %12 = tpu.iota {dimensions = array<i32: 0>} : vector<8x128xi32>
    %13 = vector.broadcast %11 : i32 to vector<8x128xi32>
    %14 = arith.addi %13, %12 : vector<8x128xi32>
    %c8_i32_6 = arith.constant 8 : i32
    %15 = vector.broadcast %c8_i32_6 : i32 to vector<8x128xi32>
    %16 = arith.cmpi slt, %14, %15 : vector<8x128xi32>
    %cst = arith.constant 0.000000e+00 : f32
    %17 = vector.broadcast %cst : f32 to vector<8x128xf32>
    %18 = arith.select %16, %8, %17 : vector<8x128xi1>, vector<8x128xf32>
    %c0_7 = arith.constant 0 : index
    %c0_8 = arith.constant 0 : index
    %19 = vector.load %arg6[%c0_7, %c0_8] : memref<8x128xf32, #tpu.memory_space<vmem>>, vector<8x128xf32>
    %20 = vector.shape_cast %18 : vector<8x128xf32> to vector<1x8x128xf32>
    %cst_9 = arith.constant dense<0.000000e+00> : vector<8x128xf32>
    %21 = vector.multi_reduction <add>, %20, %cst_9 [0] : vector<1x8x128xf32> to vector<8x128xf32>
    %22 = arith.addf %19, %21 : vector<8x128xf32>
    %c0_10 = arith.constant 0 : index
    %c0_11 = arith.constant 0 : index
    %23 = vector.load %arg6[%c0_10, %c0_11] : memref<8x128xf32, #tpu.memory_space<vmem>>, vector<8x128xf32>
    tpu.vector_store %arg6[%c0_10, %c0_11], %22 {strides = array<i32>} : memref<8x128xf32, #tpu.memory_space<vmem>>, vector<8x128xf32>,
    %c0_i32_12 = arith.constant 0 : i32
    %24 = arith.cmpi eq, %arg1, %c0_i32_12 : i32
    %25 = arith.extui %24 : i1 to i32
    %c0_i32_13 = arith.constant 0 : i32
    %26 = arith.cmpi ne, %25, %c0_i32_13 : i32
    scf.if %26 {
      %c0_14 = arith.constant 0 : index
      %c0_15 = arith.constant 0 : index
      %27 = vector.load %arg6[%c0_14, %c0_15] : memref<8x128xf32, #tpu.memory_space<vmem>>, vector<8x128xf32>
      %c0_16 = arith.constant 0 : index
      %c0_17 = arith.constant 0 : index
      %28 = vector.load %arg5[%c0_16, %c0_17] : memref<8x128xf32, #tpu.memory_space<vmem>>, vector<8x128xf32>
      tpu.vector_store %arg5[%c0_16, %c0_17], %27 {strides = array<i32>} : memref<8x128xf32, #tpu.memory_space<vmem>>, vector<8x128xf32>,
    } else {
    }
    return
  }
  func.func @transform_0(%arg0: i32, %arg1: i32) -> (i32, i32) {
    %c1_i32 = arith.constant 1 : i32
    %0 = arith.muli %arg0, %c1_i32 : i32
    %1 = arith.addi %0, %arg1 : i32
    %c0_i32 = arith.constant 0 : i32
    %2 = arith.minsi %1, %c0_i32 : i32
    %c0_i32_0 = arith.constant 0 : i32
    %c0_i32_1 = arith.constant 0 : i32
    return %2, %c0_i32_0 : i32, i32
  }
  func.func @transform_1(%arg0: i32, %arg1: i32) -> (i32, i32) {
    %c1_i32 = arith.constant 1 : i32
    %0 = arith.muli %arg0, %c1_i32 : i32
    %1 = arith.addi %0, %arg1 : i32
    %c0_i32 = arith.constant 0 : i32
    %2 = arith.minsi %1, %c0_i32 : i32
    %c0_i32_0 = arith.constant 0 : i32
    %c0_i32_1 = arith.constant 0 : i32
    return %2, %c0_i32_0 : i32, i32
  }
  func.func @transform_2(%arg0: i32, %arg1: i32) -> (i32, i32) {
    %c1_i32 = arith.constant 1 : i32
    %0 = arith.muli %arg0, %c1_i32 : i32
    %1 = arith.addi %0, %arg1 : i32
    %c0_i32 = arith.constant 0 : i32
    %2 = arith.minsi %1, %c0_i32 : i32
    %c0_i32_0 = arith.constant 0 : i32
    %c0_i32_1 = arith.constant 0 : i32
    return %2, %c0_i32_0 : i32, i32
  }
  func.func @transform_3(%arg0: i32, %arg1: i32) -> (i32, i32) {
    %c0_i32 = arith.constant 0 : i32
    %c0_i32_0 = arith.constant 0 : i32
    return %arg0, %c0_i32 : i32, i32
  }
}

</mosaic_0001>

<llo_original>
// kernel: tpu_custom_call.1
$region0: #{tpu_custom_call.1}
  #allocation0 [shape = 'u32[]', space=smem, size = 0x4, offset = 0x4, fixed_abs, tag = 'smem constant byte address 0x4 - core index']
  #allocation1 [shape = 'u32[144,128]{1,0:T(1,128)}', space=vmem, size = 0x12000, scoped, tag = 'internal scratch']
  #allocation2 [shape = 'f32[8,128]{1,0:T(8,128)}', space=vmem, size = 0x1000, scoped, tag = 'scratch operand']
  %s0 = inlined_call_operand.hbm [shape: f32[8,128], index: 0, kind: input, shape index: {}]
  %s1 = inlined_call_operand.hbm [shape: f32[8,128], index: 1, kind: input, shape index: {}]
  %s2 = inlined_call_operand.hbm [shape: f32[8,128], index: 2, kind: input, shape index: {}]
  %s3 = inlined_call_operand.hbm [shape: f32[16,128], index: 3, kind: output, shape index: {}]
  %s4 = sld [smem:[#allocation0]]
  $region65: #{tpu_custom_call.1} parent=0
    _
  %s6 = ssub.s32 1, %s4
  %s7 = scalar_select 0, %s6, %s4
  $region1: #{tpu_custom_call.1} parent=0
    #allocation3 [shape = 'u8[8192]{0}', space=vmem, size = 0x2000, scoped, tag = 'input window, operand 0']
    #allocation4 [shape = 's32[2]{0}', space=sflag, size = 0x8, scoped, tag = 'scoped memory for tpu_custom_call.1']
    #allocation5 [shape = 's32[2]{0}', space=sflag, size = 0x8, scoped, tag = 'scoped memory for tpu_custom_call.1']
    #allocation6 [shape = 'u8[8192]{0}', space=vmem, size = 0x2000, scoped, tag = 'input window, operand 1']
    #allocation7 [shape = 's32[2]{0}', space=sflag, size = 0x8, scoped, tag = 'scoped memory for tpu_custom_call.1']
    #allocation8 [shape = 'u8[8192]{0}', space=vmem, size = 0x2000, scoped, tag = 'input window, operand 2']
    #allocation9 [shape = 'u8[8192]{0}', space=vmem, size = 0x2000, scoped, tag = 'output window, operand 0']
    %8 = vsyncpa [#allocation4], 0
    %s9 = scalar_lea.sflag [#allocation4], 1
    %10 = vsyncpa %s9, 0
    %11 = vsyncpa [#allocation7], 0
    %s12 = scalar_lea.sflag [#allocation7], 1
    %13 = vsyncpa %s12, 0
    %14 = vsyncpa [#allocation5], 0
    %s15 = scalar_lea.sflag [#allocation5], 1
    %16 = vsyncpa %s15, 0
    loop: start=0, step=1, limit=4
    $region2: #{tpu_custom_call.1} parent=1 // loop_pre_header
      _
    $region3: #{tpu_custom_call.1} parent=1 // loop_header
      %s18 = sphi 0, %s22
      %p19 = scmp.ge.s32.totalorder %s18, 4
      %s25 = sphi 0, %s37
      %s26 = sphi 0, %s33
      %s27 = sphi 0, %s25
      %s28 = sphi 0, %s26
      %s29 = sphi 0, %s27
      %s30 = sphi 0, %s28
      %s46 = sphi 0, %s48
      %s49 = sphi 0, %s46
      %s50 = sphi 0, %s49
      %s66 = sphi 0, %s50
      %s78 = sphi 0, %s80
      %s81 = sphi 0, %s78
      %s82 = sphi 0, %s81
      %s98 = sphi 0, %s82
      %s110 = sphi 0, %s112
      %s113 = sphi 0, %s110
      %s114 = sphi 0, %s113
      %s130 = sphi 0, %s114
      %s136 = sphi 0, %s138
      %s139 = sphi 0, %s136
      %s140 = sphi 0, %s139
      %s156 = sphi 0, %s140
    $region4: #{tpu_custom_call.1} parent=1 // loop_header_branch
      %21 = sbr.rel (%p19) target = $region8
    $region5: #{tpu_custom_call.1} parent=1 // loop_body
      %s23 = ssub.s32 %s18, 1
      %s24 = ssub.s32 %s18, 2
      %s31 = sadd.s32 1, %s26
      %p32 = scmp.ge.s32.totalorder %s31, 1
      %s33 = scalar_select %p32, 0, %s31
      %s34 = sadd.s32 1, %s25
      %s35 = scalar_select %p32, %s34, %s25
      %p36 = scmp.ge.s32.totalorder %s35, 2
      %s37 = scalar_select %p36, 0, %s35
      %s38 = sadd.s32 %s25, %s26
      %p39 = scmp.lt.s32.totalorder %s38, 0
      %s40 = scalar_select %p39, %s38, 0
      %s41 = sadd.s32 %s37, %s33
      %p42 = scmp.lt.s32.totalorder %s41, 0
      %s43 = scalar_select %p42, %s41, 0
      %s44 = ssub.s32 %s40, %s43
      %p45 = scmp.eq.s32.totalorder %s44, 0
      %s47 = sadd.s32 %s46, 1
      %s48 = scalar_select %p45, %s46, %s47
      %p51 = pneg %p45
      %p52 = scmp.eq.s32.totalorder %s18, 1
      %p53 = por %p51, %p52
      %p54 = scmp.ne.s32.totalorder %s46, %s49
      %p55 = scmp.eq.s32.totalorder %s18, 0
      %p56 = por %p54, %p55
      %p57 = scmp.ne.s32.totalorder %s46, %s49
      %p58 = scmp.eq.s32.totalorder %s23, 1
      %p59 = por %p57, %p58
      %p60 = scmp.ne.s32.totalorder %s49, %s50
      %p61 = scmp.eq.s32.totalorder %s23, 0
      %p62 = por %p60, %p61
      %p63 = scmp.ne.s32.totalorder %s49, %s50
      %p64 = scmp.eq.s32.totalorder %s24, 1
      %p65 = por %p63, %p64
      %p67 = scmp.ne.s32.totalorder %s50, %s66
      %p68 = scmp.eq.s32.totalorder %s24, 0
      %p69 = por %p67, %p68
      %s70 = sadd.s32 %s25, %s26
      %p71 = scmp.lt.s32.totalorder %s70, 0
      %s72 = scalar_select %p71, %s70, 0
      %s73 = sadd.s32 %s37, %s33
      %p74 = scmp.lt.s32.totalorder %s73, 0
      %s75 = scalar_select %p74, %s73, 0
      %s76 = ssub.s32 %s72, %s75
      %p77 = scmp.eq.s32.totalorder %s76, 0
      %s79 = sadd.s32 %s78, 1
      %s80 = scalar_select %p77, %s78, %s79
      %p83 = pneg %p77
      %p84 = scmp.eq.s32.totalorder %s18, 1
      %p85 = por %p83, %p84
      %p86 = scmp.ne.s32.totalorder %s78, %s81
      %p87 = scmp.eq.s32.totalorder %s18, 0
      %p88 = por %p86, %p87
      %p89 = scmp.ne.s32.totalorder %s78, %s81
      %p90 = scmp.eq.s32.totalorder %s23, 1
      %p91 = por %p89, %p90
      %p92 = scmp.ne.s32.totalorder %s81, %s82
      %p93 = scmp.eq.s32.totalorder %s23, 0
      %p94 = por %p92, %p93
      %p95 = scmp.ne.s32.totalorder %s81, %s82
      %p96 = scmp.eq.s32.totalorder %s24, 1
      %p97 = por %p95, %p96
      %p99 = scmp.ne.s32.totalorder %s82, %s98
      %p100 = scmp.eq.s32.totalorder %s24, 0
      %p101 = por %p99, %p100
      %s102 = sadd.s32 %s25, %s26
      %p103 = scmp.lt.s32.totalorder %s102, 0
      %s104 = scalar_select %p103, %s102, 0
      %s105 = sadd.s32 %s37, %s33
      %p106 = scmp.lt.s32.totalorder %s105, 0
      %s107 = scalar_select %p106, %s105, 0
      %s108 = ssub.s32 %s104, %s107
      %p109 = scmp.eq.s32.totalorder %s108, 0
      %s111 = sadd.s32 %s110, 1
      %s112 = scalar_select %p109, %s110, %s111
      %p115 = pneg %p109
      %p116 = scmp.eq.s32.totalorder %s18, 1
      %p117 = por %p115, %p116
      %p118 = scmp.ne.s32.totalorder %s110, %s113
      %p119 = scmp.eq.s32.totalorder %s18, 0
      %p120 = por %p118, %p119
      %p121 = scmp.ne.s32.totalorder %s110, %s113
      %p122 = scmp.eq.s32.totalorder %s23, 1
      %p123 = por %p121, %p122
      %p124 = scmp.ne.s32.totalorder %s113, %s114
      %p125 = scmp.eq.s32.totalorder %s23, 0
      %p126 = por %p124, %p125
      %p127 = scmp.ne.s32.totalorder %s113, %s114
      %p128 = scmp.eq.s32.totalorder %s24, 1
      %p129 = por %p127, %p128
      %p131 = scmp.ne.s32.totalorder %s114, %s130
      %p132 = scmp.eq.s32.totalorder %s24, 0
      %p133 = por %p131, %p132
      %s134 = ssub.s32 %s25, %s37
      %p135 = scmp.eq.s32.totalorder %s134, 0
      %s137 = sadd.s32 %s136, 1
      %s138 = scalar_select %p135, %s136, %s137
      %p141 = pneg %p135
      %p142 = scmp.eq.s32.totalorder %s18, 1
      %p143 = por %p141, %p142
      %p144 = scmp.ne.s32.totalorder %s136, %s139
      %p145 = scmp.eq.s32.totalorder %s18, 0
      %p146 = por %p144, %p145
      %p147 = scmp.ne.s32.totalorder %s136, %s139
      %p148 = scmp.eq.s32.totalorder %s23, 1
      %p149 = por %p147, %p148
      %p150 = scmp.ne.s32.totalorder %s139, %s140
      %p151 = scmp.eq.s32.totalorder %s23, 0
      %p152 = por %p150, %p151
      %p153 = scmp.ne.s32.totalorder %s139, %s140
      %p154 = scmp.eq.s32.totalorder %s24, 1
      %p155 = por %p153, %p154
      %p157 = scmp.ne.s32.totalorder %s140, %s156
      %p158 = scmp.eq.s32.totalorder %s24, 0
      %p159 = por %p157, %p158
      %p160 = scmp.le.s32.totalorder 1, %s18
      %p161 = scmp.lt.s32.totalorder %s18, 3
      %p162 = pnand %p160, %p161
      %p163 = pneg %p162
      // Predicated region
      $region9: #{tpu_custom_call.1} parent=5 // pred_check
        _
      $region10: #{tpu_custom_call.1} parent=5 // pred_check_branch
        %165 = sbr.rel (%p162) target = $region12
      $region11: #{tpu_custom_call.1} parent=5 // pred_region
        %s166 = ssub.s32 %s18, 1
      $region12: #{tpu_custom_call.1} parent=5 // pred_fallthru
        _
      %p167 = scmp.lt.s32.totalorder %s18, 2
      // Predicated region
      $region13: #{tpu_custom_call.1} parent=5 // pred_check
        %p168 = pneg %p167
      $region14: #{tpu_custom_call.1} parent=5 // pred_check_branch
        %170 = sbr.rel (%p168) target = $region16
      $region15: #{tpu_custom_call.1} parent=5 // pred_region
        // Predicated region
        $region17: #{tpu_custom_call.1} parent=15 // pred_check
          %p171 = pneg %p56
        $region18: #{tpu_custom_call.1} parent=15 // pred_check_branch
          %173 = sbr.rel (%p171) target = $region20
        $region19: #{tpu_custom_call.1} parent=15 // pred_region
          %s174 = sand.u32 %s46, 1
          %s175 = scalar_lea.sflag [#allocation4], %s174
          %s176 = sand.u32 %s46, 1
          %s177 = smul.addr %s176, 8
          %s178 = scalar_lea.vmem [#allocation3], %s177
          %s179 = sadd.s32 %s25, %s26
          %p180 = scmp.lt.s32.totalorder %s179, 0
          %s181 = scalar_select %p180, %s179, 0
          %s183 = ssub.s32 128, 128
          %184 = vsyncadd %s175, %s183
          %s185 = smul.addr %s181, 128
          %s186 = scalar_lea.hbm %s0, %s185
          %s188 = sshll.u32 %s178, 4
          %s189 = int_to_ptr.vmem [resolvable:$true] %s188
          %191 = dma.hbm_to_vmem [thread:$0]  %s186, 128, %s189, %s175
        $region20: #{tpu_custom_call.1} parent=15 // pred_fallthru
          _
        // Predicated region
        $region21: #{tpu_custom_call.1} parent=15 // pred_check
          %p192 = pneg %p88
        $region22: #{tpu_custom_call.1} parent=15 // pred_check_branch
          %194 = sbr.rel (%p192) target = $region24
        $region23: #{tpu_custom_call.1} parent=15 // pred_region
          %s195 = sand.u32 %s18, 1
          %s196 = scalar_lea.sflag [#allocation7], %s195
          %s197 = sand.u32 %s78, 1
          %s198 = smul.addr %s197, 8
          %s199 = scalar_lea.vmem [#allocation6], %s198
          %s200 = sadd.s32 %s25, %s26
          %p201 = scmp.lt.s32.totalorder %s200, 0
          %s202 = scalar_select %p201, %s200, 0
          %s204 = ssub.s32 128, 128
          %205 = vsyncadd %s196, %s204
          %s206 = smul.addr %s202, 128
          %s207 = scalar_lea.hbm %s1, %s206
          %s209 = sshll.u32 %s199, 4
          %s210 = int_to_ptr.vmem [resolvable:$true] %s209
          %212 = dma.hbm_to_vmem [thread:$0]  %s207, 128, %s210, %s196
        $region24: #{tpu_custom_call.1} parent=15 // pred_fallthru
          _
        // Predicated region
        $region25: #{tpu_custom_call.1} parent=15 // pred_check
          %p213 = pneg %p120
        $region26: #{tpu_custom_call.1} parent=15 // pred_check_branch
          %215 = sbr.rel (%p213) target = $region28
        $region27: #{tpu_custom_call.1} parent=15 // pred_region
          %s216 = sand.u32 %s18, 1
          %s217 = scalar_lea.sflag [#allocation7], %s216
          %s218 = sand.u32 %s110, 1
          %s219 = smul.addr %s218, 8
          %s220 = scalar_lea.vmem [#allocation8], %s219
          %s221 = sadd.s32 %s25, %s26
          %p222 = scmp.lt.s32.totalorder %s221, 0
          %s223 = scalar_select %p222, %s221, 0
          %s225 = ssub.s32 128, 128
          %226 = vsyncadd %s217, %s225
          %s227 = smul.addr %s223, 128
          %s228 = scalar_lea.hbm %s2, %s227
          %s230 = sshll.u32 %s220, 4
          %s231 = int_to_ptr.vmem [resolvable:$true] %s230
          %233 = dma.hbm_to_vmem [thread:$0]  %s228, 128, %s231, %s217
        $region28: #{tpu_custom_call.1} parent=15 // pred_fallthru
          _
      $region16: #{tpu_custom_call.1} parent=5 // pred_fallthru
        _
      %p234 = scmp.le.s32.totalorder 1, %s18
      %p235 = scmp.lt.s32.totalorder %s18, 3
      %p236 = pnand %p234, %p235
      %p237 = pneg %p236
      // Predicated region
      $region29: #{tpu_custom_call.1} parent=5 // pred_check
        _
      $region30: #{tpu_custom_call.1} parent=5 // pred_check_branch
        %239 = sbr.rel (%p236) target = $region32
      $region31: #{tpu_custom_call.1} parent=5 // pred_region
        %s240 = ssub.s32 %s18, 1
        %s241 = sand.u32 %s49, 1
        %s242 = scalar_lea.sflag [#allocation4], %s241
        %s243 = sand.u32 %s49, 1
        %s244 = smul.addr %s243, 8
        %s245 = scalar_lea.vmem [#allocation3], %s244
        // Predicated region
        $region33: #{tpu_custom_call.1} parent=31 // pred_check
          %p246 = pneg %p62
        $region34: #{tpu_custom_call.1} parent=31 // pred_check_branch
          %248 = sbr.rel (%p246) target = $region36
        $region35: #{tpu_custom_call.1} parent=31 // pred_region
          %249 = dma.done %s242, 128
        $region36: #{tpu_custom_call.1} parent=31 // pred_fallthru
          _
        %s250 = sand.u32 %s23, 1
        %s251 = scalar_lea.sflag [#allocation7], %s250
        %s252 = sand.u32 %s81, 1
        %s253 = smul.addr %s252, 8
        %s254 = scalar_lea.vmem [#allocation6], %s253
        // Predicated region
        $region37: #{tpu_custom_call.1} parent=31 // pred_check
          %p255 = pneg %p94
        $region38: #{tpu_custom_call.1} parent=31 // pred_check_branch
          %257 = sbr.rel (%p255) target = $region40
        $region39: #{tpu_custom_call.1} parent=31 // pred_region
          %258 = dma.done %s251, 128
        $region40: #{tpu_custom_call.1} parent=31 // pred_fallthru
          _
        %s259 = sand.u32 %s23, 1
        %s260 = scalar_lea.sflag [#allocation7], %s259
        %s261 = sand.u32 %s113, 1
        %s262 = smul.addr %s261, 8
        %s263 = scalar_lea.vmem [#allocation8], %s262
        // Predicated region
        $region41: #{tpu_custom_call.1} parent=31 // pred_check
          %p264 = pneg %p126
        $region42: #{tpu_custom_call.1} parent=31 // pred_check_branch
          %266 = sbr.rel (%p264) target = $region44
        $region43: #{tpu_custom_call.1} parent=31 // pred_region
          %267 = dma.done %s260, 128
        $region44: #{tpu_custom_call.1} parent=31 // pred_fallthru
          _
        %s268 = sand.u32 %s49, 1
        %s269 = scalar_lea.sflag [#allocation4], %s268
        %s270 = sand.u32 %s49, 1
        %s271 = smul.addr %s270, 8
        %s272 = scalar_lea.vmem [#allocation3], %s271
        %p273 = pneg %p62
        %p274 = pneg %p59
        %s275 = sand.u32 %s23, 1
        %s276 = scalar_lea.sflag [#allocation7], %s275
        %s277 = sand.u32 %s81, 1
        %s278 = smul.addr %s277, 8
        %s279 = scalar_lea.vmem [#allocation6], %s278
        %p280 = pneg %p94
        %p281 = pneg %p91
        %s282 = sand.u32 %s23, 1
        %s283 = scalar_lea.sflag [#allocation7], %s282
        %s284 = sand.u32 %s113, 1
        %s285 = smul.addr %s284, 8
        %s286 = scalar_lea.vmem [#allocation8], %s285
        %p287 = pneg %p126
        %p288 = pneg %p123
        %p289 = pneg %p152
        %p290 = pneg %p149
        %s291 = sand.u32 %s139, 1
        %s292 = scalar_lea.sflag [#allocation5], %s291
        %s293 = sand.u32 %s139, 1
        %s294 = smul.addr %s293, 8
        %s295 = scalar_lea.vmem [#allocation9], %s294
        %s296 = sadd.s32 %s27, %s28
        %p297 = scmp.lt.s32.totalorder %s296, 0
        %s298 = scalar_select %p297, %s296, 0
        %s299 = sadd.s32 %s27, %s28
        %p300 = scmp.lt.s32.totalorder %s299, 0
        %s301 = scalar_select %p300, %s299, 0
        %s302 = sadd.s32 %s27, %s28
        %p303 = scmp.lt.s32.totalorder %s302, 0
        %s304 = scalar_select %p303, %s302, 0
        %p305 = scmp.eq.s32.totalorder %s28, 0
        // Predicated region
        $region45: #{tpu_custom_call.1} parent=31 // pred_check
          %p306 = pneg %p305
        $region46: #{tpu_custom_call.1} parent=31 // pred_check_branch
          %308 = sbr.rel (%p306) target = $region48
        $region47: #{tpu_custom_call.1} parent=31 // pred_region
          %309 = vst [vmem:[#allocation2] sm:$0xff] 0.0
        $region48: #{tpu_custom_call.1} parent=31 // pred_fallthru
          _
        %v310 = vld [vmem:[%s245] sm:$0xff]
        %v311 = vld [vmem:[%s254] sm:$0xff]
        %v312 = vld [vmem:[%s263] sm:$0xff]
        %v313 = vmul.f32 %v311, %v312
        %v314 = vsub.f32 %v310, %v313
        %v315 = vand.u32 2147483647, %v314
        %s316 = sadd.s32 %s27, %s28
        %s317 = smul.u32 %s316, 8
        %v318 = vlaneseq
        %v319 = vshrl.u32 %v318, 7
        %v320 = vstv %s317
        %v321 = vadd.s32 %v320, %v319
        %vm322 = vcmp.lt.s32.totalorder %v321, 8
        %v323 = vsel %vm322, %v315, 0.0
        %v324 = vld [vmem:[#allocation2] sm:$0xff]
        %v325 = vadd.f32 %v323, 0.0
        %v326 = vadd.f32 %v324, %v325
        %327 = vst [vmem:[#allocation2] sm:$0xff] %v326
        // Predicated region
        $region49: #{tpu_custom_call.1} parent=31 // pred_check
          %p328 = pneg %p305
        $region50: #{tpu_custom_call.1} parent=31 // pred_check_branch
          %330 = sbr.rel (%p328) target = $region52
        $region51: #{tpu_custom_call.1} parent=31 // pred_region
          %v331 = vld [vmem:[#allocation2] sm:$0xff]
          %332 = vst [vmem:[%s295] sm:$0xff] %v331
        $region52: #{tpu_custom_call.1} parent=31 // pred_fallthru
          _
        %s333 = sand.u32 %s139, 1
        %s334 = scalar_lea.sflag [#allocation5], %s333
        %s335 = sand.u32 %s139, 1
        %s336 = smul.addr %s335, 8
        %s337 = scalar_lea.vmem [#allocation9], %s336
        // Predicated region
        $region53: #{tpu_custom_call.1} parent=31 // pred_check
          %p338 = pneg %p149
        $region54: #{tpu_custom_call.1} parent=31 // pred_check_branch
          %340 = sbr.rel (%p338) target = $region56
        $region55: #{tpu_custom_call.1} parent=31 // pred_region
          %s342 = ssub.s32 128, 128
          %343 = vsyncadd %s334, %s342
          %s344 = smul.addr %s27, 128
          %s345 = scalar_lea.hbm %s3, %s344
          %s347 = sshll.u32 %s337, 4
          %s348 = int_to_ptr.vmem [resolvable:$true] %s347
          %350 = dma.vmem_to_hbm [thread:$0]  %s348, 128, %s345, %s334
        $region56: #{tpu_custom_call.1} parent=31 // pred_fallthru
          _
      $region32: #{tpu_custom_call.1} parent=5 // pred_fallthru
        _
      %p351 = scmp.le.s32.totalorder 2, %s18
      // Predicated region
      $region57: #{tpu_custom_call.1} parent=5 // pred_check
        %p352 = pneg %p351
      $region58: #{tpu_custom_call.1} parent=5 // pred_check_branch
        %354 = sbr.rel (%p352) target = $region60
      $region59: #{tpu_custom_call.1} parent=5 // pred_region
        %s355 = ssub.s32 %s18, 2
        // Predicated region
        $region61: #{tpu_custom_call.1} parent=59 // pred_check
          %p356 = pneg %p155
        $region62: #{tpu_custom_call.1} parent=59 // pred_check_branch
          %358 = sbr.rel (%p356) target = $region64
        $region63: #{tpu_custom_call.1} parent=59 // pred_region
          %s359 = sand.u32 %s140, 1
          %s360 = scalar_lea.sflag [#allocation5], %s359
          %s361 = sand.u32 %s140, 1
          %s362 = smul.addr %s361, 8
          %s363 = scalar_lea.vmem [#allocation9], %s362
          %364 = dma.done %s360, 128
        $region64: #{tpu_custom_call.1} parent=59 // pred_fallthru
          _
      $region60: #{tpu_custom_call.1} parent=5 // pred_fallthru
        _
    $region6: #{tpu_custom_call.1} parent=1 // loop_footer
      %s22 = sadd.s32 1, %s18
    $region7: #{tpu_custom_call.1} parent=1 // loop_footer_branch
      %17 = sbr.rel target = $region3
    $region8: #{tpu_custom_call.1} parent=1 // loop_exit
      _
    %365 = vsyncpa [#allocation4], 1
    %s366 = scalar_lea.sflag [#allocation4], 1
    %367 = vsyncpa %s366, 1
    %368 = vsyncpa [#allocation7], 1
    %s369 = scalar_lea.sflag [#allocation7], 1
    %370 = vsyncpa %s369, 1
    %371 = vsyncpa [#allocation5], 1
    %s372 = scalar_lea.sflag [#allocation5], 1
    %373 = vsyncpa %s372, 1

</llo_original>
